<compile_context>
chip_gen: v7x
topology: tpu7x:2x2x1
jax: 0.10.0
libtpu: 0.0.40
codegen_flags: <defaults>
</compile_context>

<pallas_src>
import jax
import jax.numpy as jnp
from jax.experimental import pallas as pl
from jax.experimental.pallas import tpu as pltpu


def temporal_attention_kernel(hidden_ref, feats_ref,
                              wd_ref, bd_ref,      # decoder_projection : (H, A), (1, A)
                              we_ref, be_ref,      # encoder_projection : (F, A), (1, A)
                              wf_ref, bf_ref,      # final_projection   : (1, A) row, (1, 1) SMEM scalar
                              attn_ref, weights_ref):
    B, S, F = feats_ref.shape
    A = wd_ref.shape[1]

    h = hidden_ref[...]                       # (B, H)
    feats = feats_ref[...]                    # (B, S, F)

    # Wh = decoder_projection(hidden)                       -> (B, A)   one MXU matmul
    wh = jnp.dot(h, wd_ref[...], preferred_element_type=jnp.float32) + bd_ref[...]

    # Uv = encoder_projection(feats), batched over (B*S)    -> (B*S, A) one MXU matmul
    uv = jnp.dot(feats.reshape(B * S, F), we_ref[...],
                 preferred_element_type=jnp.float32) + be_ref[...]
    uv = uv.reshape(B, S, A)

    # energies = final_projection(tanh(Wh.expand + Uv))     -> (B, S)
    # N=1 projection done as VPU elementwise-mul + lane reduction (no MXU).
    t = jnp.tanh(wh[:, None, :] + uv)                        # (B, S, A)
    e = jnp.sum(t * wf_ref[...].reshape(1, 1, A), axis=-1) + bf_ref[0, 0]   # (B, S)

    # softmax over the temporal axis (PyTorch dim=1), normalization fused into pooling.
    m = jnp.max(e, axis=1, keepdims=True)                    # (B, 1)
    p = jnp.exp(e - m)                                       # (B, S)
    inv = pl.reciprocal(jnp.sum(p, axis=1, keepdims=True), approx=True)     # (B, 1), EUP

    weights_ref[...] = p * inv                               # (B, S), lane-dense store
    # attn_feats = sum_s (feats * weights)                   -> (B, F), lane-dense store
    attn_ref[...] = jnp.sum(feats * p[:, :, None], axis=1) * inv


def temporal_attention(hidden, feats, params):
    """hidden: (B, H) f32; feats: (B, S, F) f32.
    Returns (attn_feats (B, F), weights (B, S, 1)) matching the PyTorch module."""
    B, H = hidden.shape
    _, S, F = feats.shape
    wd, bd, we, be, wf, bf = params

    vmem = pl.BlockSpec(memory_space=pltpu.MemorySpace.VMEM)
    smem = pl.BlockSpec(memory_space=pltpu.MemorySpace.SMEM)

    attn, weights = pl.pallas_call(
        temporal_attention_kernel,
        out_shape=(
            jax.ShapeDtypeStruct((B, F), jnp.float32),   # attn_feats
            jax.ShapeDtypeStruct((B, S), jnp.float32),   # softmax weights (lane-dense)
        ),
        in_specs=[
            vmem,          # hidden (B, H)
            vmem,          # feats  (B, S, F)
            vmem, vmem,    # decoder projection (H, A), (1, A)
            vmem, vmem,    # encoder projection (F, A), (1, A)
            vmem,          # final projection weight row (1, A)
            smem,          # final projection bias scalar (1, 1)
        ],
        out_specs=(vmem, vmem),
    )(hidden, feats, wd, bd, we, be, wf, bf)

    # PyTorch returns weights with a trailing singleton dim (B, S, 1); add it outside
    # the kernel so the in-kernel store stays lane-dense.
    return attn, weights[:, :, None]


def reference(hidden, feats, params):
    wd, bd, we, be, wf, bf = params
    Wh = hidden @ wd + bd                                   # (B, A)
    Uv = jnp.einsum("bsf,fa->bsa", feats, we) + be          # (B, S, A)
    e = jnp.einsum("bsa,a->bs", jnp.tanh(Wh[:, None, :] + Uv), wf[0]) + bf[0, 0]  # (B, S)
    w = jax.nn.softmax(e, axis=1)
    attn = jnp.sum(feats * w[:, :, None], axis=1)
    return attn, w[:, :, None]


if __name__ == "__main__":
    # cfg: decoder_hidden_size=32, feat_size=64, attn_size=32; batch=4, seq(frames)=8
    B, S, H, F, A = 4, 8, 32, 64, 32

    key = jax.random.PRNGKey(0)
    kh, kf, k1, k2, k3, k4, k5, k6 = jax.random.split(key, 8)

    hidden = jax.random.normal(kh, (B, H), dtype=jnp.float32)
    feats = jax.random.normal(kf, (B, S, F), dtype=jnp.float32)

    # Deterministic parameter init.  Matmul weights pre-transposed to (in, out);
    # the final-projection weight keeps PyTorch's native (1, A) shape; bf is (1, 1).
    params = (
        0.1 * jax.random.normal(k1, (H, A), dtype=jnp.float32),   # decoder_projection.weight.T
        0.1 * jax.random.normal(k2, (1, A), dtype=jnp.float32),   # decoder_projection.bias
        0.1 * jax.random.normal(k3, (F, A), dtype=jnp.float32),   # encoder_projection.weight.T
        0.1 * jax.random.normal(k4, (1, A), dtype=jnp.float32),   # encoder_projection.bias
        0.1 * jax.random.normal(k5, (1, A), dtype=jnp.float32),   # final_projection.weight (1, A)
        0.1 * jax.random.normal(k6, (1, 1), dtype=jnp.float32),   # final_projection.bias
    )

    attn_feats, weights = temporal_attention(hidden, feats, params)
    jax.block_until_ready((attn_feats, weights))

    ref_attn, ref_w = reference(hidden, feats, params)
    assert attn_feats.shape == (B, F) and weights.shape == (B, S, 1)
    # Tolerance slightly relaxed vs. exact-divide softmax because of the EUP
    # approximate reciprocal (rel. err ~1e-4); real bugs show up as O(0.1) errors.
    assert jnp.allclose(attn_feats, ref_attn, rtol=2e-3, atol=2e-3)
    assert jnp.allclose(weights, ref_w, rtol=2e-3, atol=2e-3)

    print("KERNEL_OK")
</pallas_src>

<mosaic_0001>
module attributes {stable_mosaic.version = 11 : i64} {
  func.func @temporal_attention_kernel(%arg0: memref<4x32xf32, #tpu.memory_space<vmem>>, %arg1: memref<4x8x64xf32, #tpu.memory_space<vmem>>, %arg2: memref<32x32xf32, #tpu.memory_space<vmem>>, %arg3: memref<1x32xf32, #tpu.memory_space<vmem>>, %arg4: memref<64x32xf32, #tpu.memory_space<vmem>>, %arg5: memref<1x32xf32, #tpu.memory_space<vmem>>, %arg6: memref<1x32xf32, #tpu.memory_space<vmem>>, %arg7: memref<1x1xf32, #tpu.memory_space<smem>>, %arg8: memref<4x64xf32, #tpu.memory_space<vmem>>, %arg9: memref<4x8xf32, #tpu.memory_space<vmem>>) attributes {dimension_semantics = [], scalar_prefetch = 0 : i64, scratch_operands = 0 : i64, tpu.core_type = #tpu.core_type<tc>} {
    %c0 = arith.constant 0 : index
    %c0_0 = arith.constant 0 : index
    %0 = vector.load %arg0[%c0, %c0_0] : memref<4x32xf32, #tpu.memory_space<vmem>>, vector<4x32xf32>
    %c0_1 = arith.constant 0 : index
    %c0_2 = arith.constant 0 : index
    %c0_3 = arith.constant 0 : index
    %1 = vector.load %arg1[%c0_1, %c0_2, %c0_3] : memref<4x8x64xf32, #tpu.memory_space<vmem>>, vector<4x8x64xf32>
    %c0_4 = arith.constant 0 : index
    %c0_5 = arith.constant 0 : index
    %2 = vector.load %arg2[%c0_4, %c0_5] : memref<32x32xf32, #tpu.memory_space<vmem>>, vector<32x32xf32>
    %cst = arith.constant dense<0.000000e+00> : vector<4x32xf32>
    %3 = tpu.matmul %0, %2, %cst {dimension_numbers = #tpu.dot_dimension_numbers<[1], [0], [0], [1], [0, 0, 1, 1], [], []>} : vector<4x32xf32>, vector<32x32xf32>, vector<4x32xf32> -> vector<4x32xf32>
    %c0_6 = arith.constant 0 : index
    %c0_7 = arith.constant 0 : index
    %4 = vector.load %arg3[%c0_6, %c0_7] : memref<1x32xf32, #tpu.memory_space<vmem>>, vector<1x32xf32>
    %5 = vector.broadcast %4 : vector<1x32xf32> to vector<4x32xf32>
    %6 = arith.addf %3, %5 : vector<4x32xf32>
    %7 = vector.shape_cast %1 : vector<4x8x64xf32> to vector<32x64xf32>
    %c0_8 = arith.constant 0 : index
    %c0_9 = arith.constant 0 : index
    %8 = vector.load %arg4[%c0_8, %c0_9] : memref<64x32xf32, #tpu.memory_space<vmem>>, vector<64x32xf32>
    %cst_10 = arith.constant dense<0.000000e+00> : vector<32x32xf32>
    %9 = tpu.matmul %7, %8, %cst_10 {dimension_numbers = #tpu.dot_dimension_numbers<[1], [0], [0], [1], [0, 0, 1, 1], [], []>} : vector<32x64xf32>, vector<64x32xf32>, vector<32x32xf32> -> vector<32x32xf32>
    %c0_11 = arith.constant 0 : index
    %c0_12 = arith.constant 0 : index
    %10 = vector.load %arg5[%c0_11, %c0_12] : memref<1x32xf32, #tpu.memory_space<vmem>>, vector<1x32xf32>
    %11 = vector.broadcast %10 : vector<1x32xf32> to vector<32x32xf32>
    %12 = arith.addf %9, %11 : vector<32x32xf32>
    %13 = vector.shape_cast %12 : vector<32x32xf32> to vector<4x8x32xf32>
    %14 = vector.shape_cast %6 : vector<4x32xf32> to vector<4x1x32xf32>
    %15 = vector.broadcast %14 : vector<4x1x32xf32> to vector<4x8x32xf32>
    %16 = arith.addf %15, %13 : vector<4x8x32xf32>
    %17 = math.tanh %16 : vector<4x8x32xf32>
    %c0_13 = arith.constant 0 : index
    %c0_14 = arith.constant 0 : index
    %18 = vector.load %arg6[%c0_13, %c0_14] : memref<1x32xf32, #tpu.memory_space<vmem>>, vector<1x32xf32>
    %19 = vector.shape_cast %18 : vector<1x32xf32> to vector<1x1x32xf32>
    %20 = vector.broadcast %19 : vector<1x1x32xf32> to vector<4x8x32xf32>
    %21 = arith.mulf %17, %20 : vector<4x8x32xf32>
    %cst_15 = arith.constant dense<0.000000e+00> : vector<4x8xf32>
    %22 = vector.multi_reduction <add>, %21, %cst_15 [2] : vector<4x8x32xf32> to vector<4x8xf32>
    %c0_16 = arith.constant 0 : index
    %c0_17 = arith.constant 0 : index
    %23 = memref.load %arg7[%c0_16, %c0_17] : memref<1x1xf32, #tpu.memory_space<smem>>
    %24 = vector.broadcast %23 : f32 to vector<4x8xf32>
    %25 = arith.addf %22, %24 : vector<4x8xf32>
    %cst_18 = arith.constant dense<0xFF800000> : vector<4xf32>
    %26 = vector.multi_reduction <maximumf>, %25, %cst_18 [1] : vector<4x8xf32> to vector<4xf32>
    %27 = vector.shape_cast %26 : vector<4xf32> to vector<4x1xf32>
    %28 = vector.broadcast %27 : vector<4x1xf32> to vector<4x8xf32>
    %29 = arith.subf %25, %28 : vector<4x8xf32>
    %30 = math.exp %29 : vector<4x8xf32>
    %cst_19 = arith.constant dense<0.000000e+00> : vector<4xf32>
    %31 = vector.multi_reduction <add>, %30, %cst_19 [1] : vector<4x8xf32> to vector<4xf32>
    %32 = vector.shape_cast %31 : vector<4xf32> to vector<4x1xf32>
    %33 = tpu.reciprocal %32 {approx = true} : vector<4x1xf32> -> vector<4x1xf32>
    %34 = vector.broadcast %33 : vector<4x1xf32> to vector<4x8xf32>
    %35 = arith.mulf %30, %34 : vector<4x8xf32>
    %c0_20 = arith.constant 0 : index
    %c0_21 = arith.constant 0 : index
    %36 = vector.load %arg9[%c0_20, %c0_21] : memref<4x8xf32, #tpu.memory_space<vmem>>, vector<4x8xf32>
    tpu.vector_store %arg9[%c0_20, %c0_21], %35 {strides = array<i32>} : memref<4x8xf32, #tpu.memory_space<vmem>>, vector<4x8xf32>,
    %37 = vector.shape_cast %30 : vector<4x8xf32> to vector<4x8x1xf32>
    %38 = vector.broadcast %37 : vector<4x8x1xf32> to vector<4x8x64xf32>
    %39 = arith.mulf %1, %38 : vector<4x8x64xf32>
    %cst_22 = arith.constant dense<0.000000e+00> : vector<4x64xf32>
    %40 = vector.multi_reduction <add>, %39, %cst_22 [1] : vector<4x8x64xf32> to vector<4x64xf32>
    %41 = vector.broadcast %33 : vector<4x1xf32> to vector<4x64xf32>
    %42 = arith.mulf %40, %41 : vector<4x64xf32>
    %c0_23 = arith.constant 0 : index
    %c0_24 = arith.constant 0 : index
    %43 = vector.load %arg8[%c0_23, %c0_24] : memref<4x64xf32, #tpu.memory_space<vmem>>, vector<4x64xf32>
    tpu.vector_store %arg8[%c0_23, %c0_24], %42 {strides = array<i32>} : memref<4x64xf32, #tpu.memory_space<vmem>>, vector<4x64xf32>,
    return
  }
}

</mosaic_0001>

<llo_original>
// kernel: tpu_custom_call.1
$region0: #{tpu_custom_call.1}
  #allocation0 [shape = 'u32[]', space=smem, size = 0x4, offset = 0x4, fixed_abs, tag = 'smem constant byte address 0x4 - core index']
  #allocation1 [shape = 'u32[144,128]{1,0:T(1,128)}', space=vmem, size = 0x12000, scoped, tag = 'internal scratch']
  #allocation2 [shape = 'f32[1,1]{1,0:T(1,128)S(6)}', space=smem, size = 0x200, scoped, tag = 'scoped memory for tpu_custom_call.1']
  %s0 = inlined_call_operand.vmem [shape: f32[4,32], index: 0, kind: input, shape index: {}]
  %s1 = inlined_call_operand.vmem [shape: f32[4,8,64], index: 1, kind: input, shape index: {}]
  %s2 = inlined_call_operand.vmem [shape: f32[32,32], index: 2, kind: input, shape index: {}]
  %s3 = inlined_call_operand.vmem [shape: f32[1,32], index: 3, kind: input, shape index: {}]
  %s4 = inlined_call_operand.vmem [shape: f32[64,32], index: 4, kind: input, shape index: {}]
  %s5 = inlined_call_operand.vmem [shape: f32[1,32], index: 5, kind: input, shape index: {}]
  %s6 = inlined_call_operand.vmem [shape: f32[1,32], index: 6, kind: input, shape index: {}]
  %s7 = inlined_call_operand.<no memory space> [shape: f32[1,1], index: 7, kind: input, shape index: {}]
  %s8 = inlined_call_operand.hbm [shape: f32[4,64], index: 8, kind: output, shape index: {0}]
  %s9 = inlined_call_operand.hbm [shape: f32[4,8], index: 9, kind: output, shape index: {1}]
  %10 = xla_tuple %s8, %s9
  %s11 = sld [smem:[#allocation0]]
  $region50: #{tpu_custom_call.1} parent=0
    _
  %s13 = ssub.s32 1, %s11
  %s14 = scalar_select 0, %s13, %s11
  %15 = sst [smem:[#allocation2]] %s7
  $region1: #{tpu_custom_call.1} parent=0
    #allocation3 [shape = 'u8[2048]{0}', space=vmem, size = 0x800, scoped, tag = 'output window, operand 0, single buffered']
    #allocation4 [shape = 's32[1]{0}', space=sflag, size = 0x4, scoped, tag = 'scoped memory for tpu_custom_call.1']
    #allocation5 [shape = 'u8[2048]{0}', space=vmem, size = 0x800, scoped, tag = 'output window, operand 1, single buffered']
    #allocation6 [shape = 's32[1]{0}', space=sflag, size = 0x4, scoped, tag = 'scoped memory for tpu_custom_call.1']
    %16 = vsyncpa [#allocation4], 0
    %17 = vsyncpa [#allocation6], 0
    // Predicated region
    $region2: #{tpu_custom_call.1} parent=1 // pred_check
      _
    $region3: #{tpu_custom_call.1} parent=1 // pred_check_branch
      %19 = sbr.rel (0) target = $region5
    $region4: #{tpu_custom_call.1} parent=1 // pred_region
      _
    $region5: #{tpu_custom_call.1} parent=1 // pred_fallthru
      _
    // Predicated region
    $region6: #{tpu_custom_call.1} parent=1 // pred_check
      _
    $region7: #{tpu_custom_call.1} parent=1 // pred_check_branch
      %21 = sbr.rel (0) target = $region9
    $region8: #{tpu_custom_call.1} parent=1 // pred_region
      _
    $region9: #{tpu_custom_call.1} parent=1 // pred_fallthru
      _
    // Predicated region
    $region10: #{tpu_custom_call.1} parent=1 // pred_check
      _
    $region11: #{tpu_custom_call.1} parent=1 // pred_check_branch
      %23 = sbr.rel (0) target = $region13
    $region12: #{tpu_custom_call.1} parent=1 // pred_region
      _
    $region13: #{tpu_custom_call.1} parent=1 // pred_fallthru
      _
    // Predicated region
    $region14: #{tpu_custom_call.1} parent=1 // pred_check
      _
    $region15: #{tpu_custom_call.1} parent=1 // pred_check_branch
      %25 = sbr.rel (0) target = $region17
    $region16: #{tpu_custom_call.1} parent=1 // pred_region
      _
    $region17: #{tpu_custom_call.1} parent=1 // pred_fallthru
      _
    // Predicated region
    $region18: #{tpu_custom_call.1} parent=1 // pred_check
      _
    $region19: #{tpu_custom_call.1} parent=1 // pred_check_branch
      %27 = sbr.rel (0) target = $region21
    $region20: #{tpu_custom_call.1} parent=1 // pred_region
      _
    $region21: #{tpu_custom_call.1} parent=1 // pred_fallthru
      _
    // Predicated region
    $region22: #{tpu_custom_call.1} parent=1 // pred_check
      _
    $region23: #{tpu_custom_call.1} parent=1 // pred_check_branch
      %29 = sbr.rel (0) target = $region25
    $region24: #{tpu_custom_call.1} parent=1 // pred_region
      _
    $region25: #{tpu_custom_call.1} parent=1 // pred_fallthru
      _
    // Predicated region
    $region26: #{tpu_custom_call.1} parent=1 // pred_check
      _
    $region27: #{tpu_custom_call.1} parent=1 // pred_check_branch
      %31 = sbr.rel (0) target = $region29
    $region28: #{tpu_custom_call.1} parent=1 // pred_region
      _
    $region29: #{tpu_custom_call.1} parent=1 // pred_fallthru
      _
    // Predicated region
    $region30: #{tpu_custom_call.1} parent=1 // pred_check
      _
    $region31: #{tpu_custom_call.1} parent=1 // pred_check_branch
      %33 = sbr.rel (0) target = $region33
    $region32: #{tpu_custom_call.1} parent=1 // pred_region
      _
    $region33: #{tpu_custom_call.1} parent=1 // pred_fallthru
      _
    %v34 = vld [vmem:[%s0] sm:$0xf]
    %v35 = vld [vmem:[%s1] sm:$0xff]
    %v36 = vld [vmem:[%s1 + $0x8] sm:$0xff]
    %v37 = vld [vmem:[%s1 + $0x10] sm:$0xff]
    %v38 = vld [vmem:[%s1 + $0x18] sm:$0xff]
    %v39 = vld [vmem:[%s2] sm:$0xff]
    %v40 = vld [vmem:[%s2 + $0x8] sm:$0xff]
    %v41 = vld [vmem:[%s2 + $0x10] sm:$0xff]
    %v42 = vld [vmem:[%s2 + $0x18] sm:$0xff]
    %v43 = vld [vmem:[%s3] sm:$0x1]
    %v45 = vlaneseq
    %v46 = vshrl.u32 %v45, 7
    %v47 = vsub.s32 0, %v46
    %v48 = vrot.slane %v43, %v47
    %vm50 = vcmask 261120
    %v52 = vsel %vm50, %v34, 0
    %54 = vmatprep.subr.mxu0 0.0
    %55 = vmatpush1.msra.mxu0 %v39
    %56 = vmatprep.subr.mxu0 0.0
    %57 = vmatpush1.msra.mxu0 %v40
    %58 = vmatprep.subr.mxu0 0.0
    %59 = vmatpush1.msra.mxu0 %v41
    %60 = vmatprep.subr.mxu0 0.0
    %61 = vmatpush1.msra.mxu0 %v42
    %62 = vmatprep.subr.mxu0 0.0
    %63 = vmatpush1.msra.mxu0 0.0
    %64 = vmatprep.subr.mxu0 0.0
    %65 = vmatpush1.msra.mxu0 0.0
    %66 = vmatprep.subr.mxu0 0.0
    %67 = vmatpush1.msra.mxu0 0.0
    %68 = vmatprep.subr.mxu0 0.0
    %69 = vmatpush1.msra.mxu0 0.0
    %70 = vmatprep.subr.mxu0 0.0
    %71 = vmatpush1.msra.mxu0 0.0
    %72 = vmatprep.subr.mxu0 0.0
    %73 = vmatpush1.msra.mxu0 0.0
    %74 = vmatprep.subr.mxu0 0.0
    %75 = vmatpush1.msra.mxu0 0.0
    %76 = vmatprep.subr.mxu0 0.0
    %77 = vmatpush1.msra.mxu0 0.0
    %78 = vmatprep.subr.mxu0 0.0
    %79 = vmatpush1.msra.mxu0 0.0
    %80 = vmatprep.subr.mxu0 0.0
    %81 = vmatpush1.msra.mxu0 0.0
    %82 = vmatprep.subr.mxu0 0.0
    %83 = vmatpush1.msra.mxu0 0.0
    %84 = vmatprep.subr.mxu0 0.0
    %85 = vmatpush1.msra.mxu0 0.0
    %86 = vmatprep.subr.mxu0 0.0
    %87 = vmatpush1.msra.mxu0 0.0
    %88 = vmatprep.subr.mxu0 0.0
    %89 = vmatpush1.msra.mxu0 0.0
    %90 = vmatprep.subr.mxu0 0.0
    %91 = vmatpush1.msra.mxu0 0.0
    %92 = vmatprep.subr.mxu0 0.0
    %93 = vmatpush1.msra.mxu0 0.0
    %94 = vmatprep.subr.mxu0 0.0
    %95 = vmatpush1.msra.mxu0 0.0
    %96 = vmatprep.subr.mxu0 0.0
    %97 = vmatpush1.msra.mxu0 0.0
    %98 = vmatprep.subr.mxu0 0.0
    %99 = vmatpush1.msra.mxu0 0.0
    %100 = vmatprep.subr.mxu0 0.0
    %101 = vmatpush1.msra.mxu0 0.0
    %102 = vmatprep.subr.mxu0 0.0
    %103 = vmatpush1.msra.mxu0 0.0
    %104 = vmatprep.subr.mxu0 0.0
    %105 = vmatpush1.msra.mxu0 0.0
    %106 = vmatprep.subr.mxu0 0.0
    %107 = vmatpush1.msra.mxu0 0.0
    %108 = vmatprep.subr.mxu0 0.0
    %109 = vmatpush1.msra.mxu0 0.0
    %110 = vmatprep.subr.mxu0 0.0
    %111 = vmatpush1.msra.mxu0 0.0
    %112 = vmatprep.subr.mxu0 0.0
    %113 = vmatpush1.msra.mxu0 0.0
    %114 = vmatprep.subr.mxu0 0.0
    %115 = vmatpush1.msra.mxu0 0.0
    %116 = vmatprep.subr.mxu0 0.0
    %117 = vmatpush1.msra.mxu0 0.0
    %118 = vmatprep.mubr.f32.mxu0 0.0
    %119 = vmatmul.mubr.f32.gmra.mrb[0].mxu0 %v52
    %v120 = vpop.f32.mrb[0].mxu0
    %v121 = vadd.f32 %v48, %v120
    %v122 = vpop.f32.mrb[0].mxu0
    %123 = vdwg.mxu0
    %v124 = vld [vmem:[%s4] sm:$0xff]
    %v125 = vld [vmem:[%s4 + $0x8] sm:$0xff]
    %v126 = vld [vmem:[%s4 + $0x10] sm:$0xff]
    %v127 = vld [vmem:[%s4 + $0x18] sm:$0xff]
    %v128 = vld [vmem:[%s4 + $0x20] sm:$0xff]
    %v129 = vld [vmem:[%s4 + $0x28] sm:$0xff]
    %v130 = vld [vmem:[%s4 + $0x30] sm:$0xff]
    %v131 = vld [vmem:[%s4 + $0x38] sm:$0xff]
    %v132 = vld [vmem:[%s5] sm:$0x1]
    %v134 = vlaneseq
    %v135 = vshrl.u32 %v134, 7
    %v136 = vsub.s32 0, %v135
    %v137 = vrot.slane %v132, %v136
    %vm139 = vcmask 523264
    %v141 = vsel %vm139, %v35, 0
    %v144 = vsel %vm139, %v36, 0
    %v147 = vsel %vm139, %v37, 0
    %v150 = vsel %vm139, %v38, 0
    %152 = vmatprep.subr.mxu0 0.0
    %153 = vmatpush1.msra.mxu0 %v124
    %154 = vmatprep.subr.mxu0 0.0
    %155 = vmatpush1.msra.mxu0 %v125
    %156 = vmatprep.subr.mxu0 0.0
    %157 = vmatpush1.msra.mxu0 %v126
    %158 = vmatprep.subr.mxu0 0.0
    %159 = vmatpush1.msra.mxu0 %v127
    %160 = vmatprep.subr.mxu0 0.0
    %161 = vmatpush1.msra.mxu0 %v128
    %162 = vmatprep.subr.mxu0 0.0
    %163 = vmatpush1.msra.mxu0 %v129
    %164 = vmatprep.subr.mxu0 0.0
    %165 = vmatpush1.msra.mxu0 %v130
    %166 = vmatprep.subr.mxu0 0.0
    %167 = vmatpush1.msra.mxu0 %v131
    %168 = vmatprep.subr.mxu0 0.0
    %169 = vmatpush1.msra.mxu0 0.0
    %170 = vmatprep.subr.mxu0 0.0
    %171 = vmatpush1.msra.mxu0 0.0
    %172 = vmatprep.subr.mxu0 0.0
    %173 = vmatpush1.msra.mxu0 0.0
    %174 = vmatprep.subr.mxu0 0.0
    %175 = vmatpush1.msra.mxu0 0.0
    %176 = vmatprep.subr.mxu0 0.0
    %177 = vmatpush1.msra.mxu0 0.0
    %178 = vmatprep.subr.mxu0 0.0
    %179 = vmatpush1.msra.mxu0 0.0
    %180 = vmatprep.subr.mxu0 0.0
    %181 = vmatpush1.msra.mxu0 0.0
    %182 = vmatprep.subr.mxu0 0.0
    %183 = vmatpush1.msra.mxu0 0.0
    %184 = vmatprep.subr.mxu0 0.0
    %185 = vmatpush1.msra.mxu0 0.0
    %186 = vmatprep.subr.mxu0 0.0
    %187 = vmatpush1.msra.mxu0 0.0
    %188 = vmatprep.subr.mxu0 0.0
    %189 = vmatpush1.msra.mxu0 0.0
    %190 = vmatprep.subr.mxu0 0.0
    %191 = vmatpush1.msra.mxu0 0.0
    %192 = vmatprep.subr.mxu0 0.0
    %193 = vmatpush1.msra.mxu0 0.0
    %194 = vmatprep.subr.mxu0 0.0
    %195 = vmatpush1.msra.mxu0 0.0
    %196 = vmatprep.subr.mxu0 0.0
    %197 = vmatpush1.msra.mxu0 0.0
    %198 = vmatprep.subr.mxu0 0.0
    %199 = vmatpush1.msra.mxu0 0.0
    %200 = vmatprep.subr.mxu0 0.0
    %201 = vmatpush1.msra.mxu0 0.0
    %202 = vmatprep.subr.mxu0 0.0
    %203 = vmatpush1.msra.mxu0 0.0
    %204 = vmatprep.subr.mxu0 0.0
    %205 = vmatpush1.msra.mxu0 0.0
    %206 = vmatprep.subr.mxu0 0.0
    %207 = vmatpush1.msra.mxu0 0.0
    %208 = vmatprep.subr.mxu0 0.0
    %209 = vmatpush1.msra.mxu0 0.0
    %210 = vmatprep.subr.mxu0 0.0
    %211 = vmatpush1.msra.mxu0 0.0
    %212 = vmatprep.subr.mxu0 0.0
    %213 = vmatpush1.msra.mxu0 0.0
    %214 = vmatprep.subr.mxu0 0.0
    %215 = vmatpush1.msra.mxu0 0.0
    %216 = vmatprep.mubr.f32.mxu0 0.0
    %217 = vmatmul.mubr.f32.gmra.mrb[0].mxu0 %v141
    %v218 = vpop.f32.mrb[0].mxu0
    %v219 = vadd.f32 %v137, %v218
    %v220 = vpop.f32.mrb[0].mxu0
    %221 = vmatprep.mubr.f32.mxu0 0.0
    %222 = vmatmul.mubr.f32.gmra.mrb[0].mxu0 %v144
    %v223 = vpop.f32.mrb[0].mxu0
    %v224 = vadd.f32 %v137, %v223
    %v225 = vpop.f32.mrb[0].mxu0
    %226 = vmatprep.mubr.f32.mxu0 0.0
    %227 = vmatmul.mubr.f32.gmra.mrb[0].mxu0 %v147
    %v228 = vpop.f32.mrb[0].mxu0
    %v229 = vadd.f32 %v137, %v228
    %v230 = vpop.f32.mrb[0].mxu0
    %231 = vmatprep.mubr.f32.mxu0 0.0
    %232 = vmatmul.mubr.f32.gmra.mrb[0].mxu0 %v150
    %v233 = vpop.f32.mrb[0].mxu0
    %v234 = vadd.f32 %v137, %v233
    %v235 = vpop.f32.mrb[0].mxu0
    %236 = vdwg.mxu0
    %v239 = vunpack.c.l.s4 1966171168
    %v240 = vunpack.c.0.s8 %v239
    %v241 = vlaneseq
    %v242 = vshrl.u32 %v241, 7
    %v243 = vsub.s32 %v240, %v242
    %v244 = vrot.slane %v121, %v243
    %v245 = vcombine.high %v244, %v244
    %v247 = vunpack.c.l.s4 1966171168
    %v248 = vunpack.c.0.s8 %v247
    %v249 = vlaneseq
    %v250 = vshrl.u32 %v249, 7
    %v251 = vsub.s32 %v248, %v250
    %v252 = vrot.slane %v244, %v251
    %v254 = vunpack.c.l.s4 1966171168
    %v255 = vunpack.c.0.s8 %v254
    %v256 = vlaneseq
    %v257 = vshrl.u32 %v256, 7
    %v258 = vsub.s32 %v255, %v257
    %v259 = vrot.slane %v245, %v258
    %v260 = vcombine.high %v252, %v252
    %v261 = vcombine.high %v259, %v259
    %v262 = vlaneseq
    %v263 = vshrl.u32 %v262, 7
    %v264 = vsub.s32 0, %v263
    %v265 = vrot.slane %v252, %v264
    %v266 = vlaneseq
    %v267 = vshrl.u32 %v266, 7
    %v268 = vsub.s32 0, %v267
    %v269 = vrot.slane %v259, %v268
    %v270 = vlaneseq
    %v271 = vshrl.u32 %v270, 7
    %v272 = vsub.s32 0, %v271
    %v273 = vrot.slane %v260, %v272
    %v274 = vlaneseq
    %v275 = vshrl.u32 %v274, 7
    %v276 = vsub.s32 0, %v275
    %v277 = vrot.slane %v261, %v276
    %v282 = vadd.f32 %v265, %v219
    %v283 = vadd.f32 %v269, %v224
    %v284 = vadd.f32 %v273, %v229
    %v285 = vadd.f32 %v277, %v234
    %v286 = vtanh.pop %v282
    %v287 = vtanh.pop %v283
    %v288 = vtanh.pop %v284
    %v289 = vtanh.pop %v285
    %v290 = vld [vmem:[%s6] sm:$0x1]
    %v292 = vlaneseq
    %v293 = vshrl.u32 %v292, 7
    %v294 = vsub.s32 0, %v293
    %v295 = vrot.slane %v290, %v294
    %v297 = vmul.f32 %v286, %v295
    %v298 = vmul.f32 %v287, %v295
    %v299 = vmul.f32 %v288, %v295
    %v300 = vmul.f32 %v289, %v295
    %v301 = vsel %vm50, %v297, 0.0
    %302 = vadd.xlane.f32.xlu0 %v301
    %v303 = vpop.xlane.xlu0 %302
    %v304 = vsel %vm50, %v298, 0.0
    %305 = vadd.xlane.f32.xlu0 %v304
    %v306 = vpop.xlane.xlu0 %305
    %v307 = vsel %vm50, %v299, 0.0
    %308 = vadd.xlane.f32.xlu0 %v307
    %v309 = vpop.xlane.xlu0 %308
    %v310 = vsel %vm50, %v300, 0.0
    %311 = vadd.xlane.f32.xlu0 %v310
    %v312 = vpop.xlane.xlu0 %311
    %s313 = sld [smem:[#allocation2]]
    %v314 = vstv %s313
    %v315 = vadd.f32 %v303, %v314
    %v316 = vadd.f32 %v306, %v314
    %v317 = vadd.f32 %v309, %v314
    %v318 = vadd.f32 %v312, %v314
    %v323 = vlaneseq
    %v324 = vand.u32 %v323, 127
    %v325 = vlaneseq
    %v326 = vshrl.u32 %v325, 7
    %v327 = vsub.s32 %v324, %v326
    %v328 = vrot.slane %v315, %v327
    %v329 = vlaneseq
    %v330 = vshrl.u32 %v329, 7
    %v331 = vsub.s32 %v324, %v330
    %v332 = vrot.slane %v316, %v331
    %v333 = vlaneseq
    %v334 = vshrl.u32 %v333, 7
    %v335 = vsub.s32 %v324, %v334
    %v336 = vrot.slane %v317, %v335
    %v337 = vlaneseq
    %v338 = vshrl.u32 %v337, 7
    %v339 = vsub.s32 %v324, %v338
    %v340 = vrot.slane %v318, %v339
    %vm341 = vcmask 1041409
    %v342 = vsel %vm341, %v332, %v328
    %vm343 = vcmask 1042434
    %v344 = vsel %vm343, %v336, %v342
    %vm345 = vcmask 1043459
    %v346 = vsel %vm345, %v340, %v344
    %vm348 = vcmask 60416
    %v349 = vsel %vm348, %v346, -inf
    %350 = vmax.xlane.f32.xlu0 %v349
    %v351 = vpop.xlane.xlu0 %350
    %v353 = vlaneseq
    %v354 = vshrl.u32 %v353, 7
    %v355 = vsub.s32 0, %v354
    %v356 = vrot.slane %v351, %v355
    %v357 = vlaneseq
    %v358 = vshrl.u32 %v357, 7
    %v359 = vsub.s32 1, %v358
    %v360 = vrot.slane %v351, %v359
    %v361 = vlaneseq
    %v362 = vshrl.u32 %v361, 7
    %v363 = vsub.s32 2, %v362
    %v364 = vrot.slane %v351, %v363
    %v365 = vlaneseq
    %v366 = vshrl.u32 %v365, 7
    %v367 = vsub.s32 3, %v366
    %v368 = vrot.slane %v351, %v367
    %v373 = vsub.f32 %v315, %v356
    %v374 = vsub.f32 %v316, %v360
    %v375 = vsub.f32 %v317, %v364
    %v376 = vsub.f32 %v318, %v368
    %v377 = vmul.f32 %v373, 1.442695
    %v378 = vpow.pop %v377
    %v379 = vmul.f32 %v374, 1.442695
    %v380 = vpow.pop %v379
    %v381 = vmul.f32 %v375, 1.442695
    %v382 = vpow.pop %v381
    %v383 = vmul.f32 %v376, 1.442695
    %v384 = vpow.pop %v383
    %389 = vset.pattern.permute.xlu0 0
    %390 = vperm.xlu0 %389, %v378
    %v391 = vpop.permute.xlu0 %390
    %392 = vset.pattern.permute.xlu0 0
    %393 = vperm.xlu0 %392, %v380
    %v394 = vpop.permute.xlu0 %393
    %395 = vset.pattern.permute.xlu0 0
    %396 = vperm.xlu0 %395, %v382
    %v397 = vpop.permute.xlu0 %396
    %398 = vset.pattern.permute.xlu0 0
    %399 = vperm.xlu0 %398, %v384
    %v400 = vpop.permute.xlu0 %399
    %v401 = vlaneseq
    %v402 = vshrl.u32 %v401, 7
    %v403 = vsub.s32 %v324, %v402
    %v404 = vrot.slane %v391, %v403
    %v405 = vlaneseq
    %v406 = vshrl.u32 %v405, 7
    %v407 = vsub.s32 %v324, %v406
    %v408 = vrot.slane %v394, %v407
    %v409 = vlaneseq
    %v410 = vshrl.u32 %v409, 7
    %v411 = vsub.s32 %v324, %v410
    %v412 = vrot.slane %v397, %v411
    %v413 = vlaneseq
    %v414 = vshrl.u32 %v413, 7
    %v415 = vsub.s32 %v324, %v414
    %v416 = vrot.slane %v400, %v415
    %v417 = vsel %vm341, %v408, %v404
    %v418 = vsel %vm343, %v412, %v417
    %v419 = vsel %vm345, %v416, %v418
    %v421 = vsel %vm348, %v419, 0.0
    %422 = vadd.xlane.f32.xlu0 %v421
    %v423 = vpop.xlane.xlu0 %422
    %v424 = vrcp.pop %v423
    %v426 = vlaneseq
    %v427 = vshrl.u32 %v426, 7
    %v428 = vsub.s32 0, %v427
    %v429 = vrot.slane %v424, %v428
    %v430 = vlaneseq
    %v431 = vshrl.u32 %v430, 7
    %v432 = vsub.s32 1, %v431
    %v433 = vrot.slane %v424, %v432
    %v434 = vlaneseq
    %v435 = vshrl.u32 %v434, 7
    %v436 = vsub.s32 2, %v435
    %v437 = vrot.slane %v424, %v436
    %v438 = vlaneseq
    %v439 = vshrl.u32 %v438, 7
    %v440 = vsub.s32 3, %v439
    %v441 = vrot.slane %v424, %v440
    %v446 = vmul.f32 %v378, %v429
    %v447 = vmul.f32 %v380, %v433
    %v448 = vmul.f32 %v382, %v437
    %v449 = vmul.f32 %v384, %v441
    %454 = vset.pattern.permute.xlu0 0
    %455 = vperm.xlu0 %454, %v446
    %v456 = vpop.permute.xlu0 %455
    %457 = vset.pattern.permute.xlu0 0
    %458 = vperm.xlu0 %457, %v447
    %v459 = vpop.permute.xlu0 %458
    %460 = vset.pattern.permute.xlu0 0
    %461 = vperm.xlu0 %460, %v448
    %v462 = vpop.permute.xlu0 %461
    %463 = vset.pattern.permute.xlu0 0
    %464 = vperm.xlu0 %463, %v449
    %v465 = vpop.permute.xlu0 %464
    %v466 = vlaneseq
    %v467 = vshrl.u32 %v466, 7
    %v468 = vsub.s32 %v324, %v467
    %v469 = vrot.slane %v456, %v468
    %v470 = vlaneseq
    %v471 = vshrl.u32 %v470, 7
    %v472 = vsub.s32 %v324, %v471
    %v473 = vrot.slane %v459, %v472
    %v474 = vlaneseq
    %v475 = vshrl.u32 %v474, 7
    %v476 = vsub.s32 %v324, %v475
    %v477 = vrot.slane %v462, %v476
    %v478 = vlaneseq
    %v479 = vshrl.u32 %v478, 7
    %v480 = vsub.s32 %v324, %v479
    %v481 = vrot.slane %v465, %v480
    %v482 = vsel %vm341, %v473, %v469
    %v483 = vsel %vm343, %v477, %v482
    %v484 = vsel %vm345, %v481, %v483
    %486 = vst.msk [vmem:[#allocation5] sm:$0xf] %vm348, %v484
    %v491 = vmul.f32 %v35, %v391
    %v492 = vmul.f32 %v36, %v394
    %v493 = vmul.f32 %v37, %v397
    %v494 = vmul.f32 %v38, %v400
    %v495 = vsel %vm139, %v491, 0.0
    %v496 = vrot.slane %v495, 4
    %v497 = vadd.f32 %v495, %v496
    %v498 = vrot.slane %v497, 2
    %v499 = vadd.f32 %v497, %v498
    %v500 = vrot.slane %v499, 1
    %v501 = vadd.f32 %v499, %v500
    %v502 = vsel %vm139, %v492, 0.0
    %v503 = vrot.slane %v502, 4
    %v504 = vadd.f32 %v502, %v503
    %v505 = vrot.slane %v504, 2
    %v506 = vadd.f32 %v504, %v505
    %v507 = vrot.slane %v506, 1
    %v508 = vadd.f32 %v506, %v507
    %v509 = vsel %vm139, %v493, 0.0
    %v510 = vrot.slane %v509, 4
    %v511 = vadd.f32 %v509, %v510
    %v512 = vrot.slane %v511, 2
    %v513 = vadd.f32 %v511, %v512
    %v514 = vrot.slane %v513, 1
    %v515 = vadd.f32 %v513, %v514
    %v516 = vsel %vm139, %v494, 0.0
    %v517 = vrot.slane %v516, 4
    %v518 = vadd.f32 %v516, %v517
    %v519 = vrot.slane %v518, 2
    %v520 = vadd.f32 %v518, %v519
    %v521 = vrot.slane %v520, 1
    %v522 = vadd.f32 %v520, %v521
    %v523 = vrot.slane %v424, 1
    %v524 = vrot.slane %v424, 2
    %v525 = vrot.slane %v424, 3
    %v530 = vmul.f32 %v501, %v424
    %v531 = vmul.f32 %v508, %v523
    %v532 = vmul.f32 %v515, %v524
    %v533 = vmul.f32 %v522, %v525
    %v538 = vrot.slane %v531, 7
    %v539 = vsel %vm341, %v538, %v530
    %v540 = vrot.slane %v532, 6
    %v541 = vsel %vm343, %v540, %v539
    %v542 = vrot.slane %v533, 5
    %v543 = vsel %vm345, %v542, %v541
    %vm545 = vcmask 519168
    %546 = vst.msk [vmem:[#allocation3] sm:$0xf] %vm545, %v543
    // Predicated region
    $region34: #{tpu_custom_call.1} parent=1 // pred_check
      _
    $region35: #{tpu_custom_call.1} parent=1 // pred_check_branch
      %548 = sbr.rel (0) target = $region37
    $region36: #{tpu_custom_call.1} parent=1 // pred_region
      %s550 = ssub.s32 64, 64
      %551 = vsyncadd [#allocation4], %s550
      %s553 = sshll.u32 [#allocation3], 4
      %s554 = int_to_ptr.vmem [resolvable:$true] %s553
      %556 = dma.vmem_to_hbm [thread:$0]  %s554, 64, %s8, [#allocation4]
    $region37: #{tpu_custom_call.1} parent=1 // pred_fallthru
      _
    // Predicated region
    $region38: #{tpu_custom_call.1} parent=1 // pred_check
      _
    $region39: #{tpu_custom_call.1} parent=1 // pred_check_branch
      %558 = sbr.rel (0) target = $region41
    $region40: #{tpu_custom_call.1} parent=1 // pred_region
      %s560 = ssub.s32 64, 64
      %561 = vsyncadd [#allocation6], %s560
      %s563 = sshll.u32 [#allocation5], 4
      %s564 = int_to_ptr.vmem [resolvable:$true] %s563
      %566 = dma.vmem_to_hbm [thread:$0]  %s564, 64, %s9, [#allocation6]
    $region41: #{tpu_custom_call.1} parent=1 // pred_fallthru
      _
    // Predicated region
    $region42: #{tpu_custom_call.1} parent=1 // pred_check
      _
    $region43: #{tpu_custom_call.1} parent=1 // pred_check_branch
      %568 = sbr.rel (0) target = $region45
    $region44: #{tpu_custom_call.1} parent=1 // pred_region
      %569 = dma.done [#allocation4], 64
    $region45: #{tpu_custom_call.1} parent=1 // pred_fallthru
      _
    // Predicated region
    $region46: #{tpu_custom_call.1} parent=1 // pred_check
      _
    $region47: #{tpu_custom_call.1} parent=1 // pred_check_branch
      %571 = sbr.rel (0) target = $region49
    $region48: #{tpu_custom_call.1} parent=1 // pred_region
      %572 = dma.done [#allocation6], 64
    $region49: #{tpu_custom_call.1} parent=1 // pred_fallthru
      _
    %573 = vsyncpa [#allocation4], 1
    %574 = vsyncpa [#allocation6], 1

</llo_original>
